<compile_context>
chip_gen: v6e
topology: v6e:2x2x1
jax: 0.10.0
libtpu: 0.0.40
codegen_flags: <defaults>
</compile_context>

<pallas_src>
import jax
import jax.numpy as jnp
from jax.experimental import pallas as pl
from jax.experimental.pallas import tpu as pltpu


# ------------------------------ tiling helpers -------------------------------

def _pick_tile(dim, preferred, align):
    """Largest tile <= `preferred` that divides `dim` and is `align`-aligned,
    falling back to the full dimension (always a legal block size)."""
    if dim <= preferred:
        return dim
    t = (preferred // align) * align
    while t >= align:
        if dim % t == 0:
            return t
        t -= align
    return dim


def _rotate_half(x):
    # torch rotate_half: cat(-x[..., d/2:], x[..., :d/2]).  Static lane slices;
    # only used outside the attention inner loop.
    h = x.shape[-1] // 2
    return jnp.concatenate([-x[:, h:], x[:, :h]], axis=-1)


# ------------------------------ tiled linear ---------------------------------

_CAST_MXU_INPUTS_TO_BF16 = True   # f32 weights/activations -> bf16 MXU inputs


def _linear_kernel(x_ref, w_ref, b_ref, o_ref, acc_ref):
    @pl.when(pl.program_id(2) == 0)
    def _init():
        acc_ref[...] = jnp.zeros(acc_ref.shape, acc_ref.dtype)

    x = x_ref[...]
    w = w_ref[...]
    if _CAST_MXU_INPUTS_TO_BF16 and x.dtype == jnp.float32:
        x = x.astype(jnp.bfloat16)
    if _CAST_MXU_INPUTS_TO_BF16 and w.dtype == jnp.float32:
        w = w.astype(jnp.bfloat16)
    acc_ref[...] += jnp.dot(x, w, preferred_element_type=jnp.float32)

    @pl.when(pl.program_id(2) == pl.num_programs(2) - 1)
    def _finalize():
        o_ref[...] = (acc_ref[...] + b_ref[...].astype(jnp.float32)
                      ).astype(o_ref.dtype)


def linear(x, w, b, *, tm_pref=256, tn_pref=256, tk_pref=512):
    """x @ w + b with x:(M,K), w:(K,N), b:(N,), tiled + pipelined.
    bf16 MXU inputs, f32 accumulation.  ~2-3 MiB VMEM at 256/256/512 tiles, so
    no vmem_limit_bytes override is needed even on v7x."""
    M, K = x.shape
    N = w.shape[1]
    tm = _pick_tile(M, tm_pref, 16)     # 16-aligned for bf16 sublane packing
    tn = _pick_tile(N, tn_pref, 128)
    tk = _pick_tile(K, tk_pref, 128)
    grid = (M // tm, N // tn, K // tk)
    return pl.pallas_call(
        _linear_kernel,
        out_shape=jax.ShapeDtypeStruct((M, N), x.dtype),
        grid=grid,
        in_specs=[
            pl.BlockSpec((tm, tk), lambda i, j, k: (i, k)),
            pl.BlockSpec((tk, tn), lambda i, j, k: (k, j)),
            pl.BlockSpec((1, tn), lambda i, j, k: (0, j)),
        ],
        out_specs=pl.BlockSpec((tm, tn), lambda i, j, k: (i, j)),
        scratch_shapes=[pltpu.VMEM((tm, tn), jnp.float32)],
        compiler_params=pltpu.CompilerParams(
            dimension_semantics=("parallel", "parallel", "arbitrary")),
    )(x, w, b.reshape(1, N))


# ---------------------------- K RoPE pre-pass ---------------------------------

def _rope_k_kernel(k_ref, cos_ref, sin_ref, o_ref):
    k = k_ref[...].astype(jnp.float32)
    c = cos_ref[...].astype(jnp.float32)
    s = sin_ref[...].astype(jnp.float32)
    o_ref[...] = (k * c + _rotate_half(k) * s).astype(o_ref.dtype)


def rope_k(qkv, cos, sin, *, b, S, n_heads, n_kv, D):
    """Apply RoPE to the K columns of the fused qkv activation (hoisted out of
    the attention kv loop).  qkv:(b*S,(n_heads+2*n_kv)*D) -> k_rot:(b*S,n_kv*D)."""
    TR = _pick_tile(S, 256, 8)
    nrb = S // TR
    grid = (b, nrb, n_kv)
    return pl.pallas_call(
        _rope_k_kernel,
        out_shape=jax.ShapeDtypeStruct((b * S, n_kv * D), qkv.dtype),
        grid=grid,
        in_specs=[
            # K columns live at column-block offset n_heads (block width D).
            pl.BlockSpec((TR, D), lambda bi, si, hi: (bi * nrb + si, n_heads + hi)),
            pl.BlockSpec((TR, D), lambda bi, si, hi: (si, 0)),
            pl.BlockSpec((TR, D), lambda bi, si, hi: (si, 0)),
        ],
        out_specs=pl.BlockSpec((TR, D), lambda bi, si, hi: (bi * nrb + si, hi)),
        compiler_params=pltpu.CompilerParams(
            dimension_semantics=("parallel", "parallel", "parallel")),
    )(qkv, cos, sin)


# --------------------------- flash attention core ----------------------------

def _flash_attn_kernel(q_ref, k_ref, v_ref, cos_ref, sin_ref, o_ref,
                       q_scr, m_scr, l_scr, acc_scr):
    TQ, GD = q_ref.shape            # q tile: (TQ, G*D) lane-dense slab
    TKV, D = k_ref.shape            # k/v tile: (TKV, D); K already rotated
    G = GD // D
    qi = pl.program_id(2)
    ki = pl.program_id(3)
    nk = pl.num_programs(3)

    @pl.when(ki == 0)
    def _init():
        # Q RoPE (+ folded 1/sqrt(D) scale), once per q element per kv sweep.
        cq = cos_ref[...].astype(jnp.float32)     # (TQ, D), pre-scaled
        sq = sin_ref[...].astype(jnp.float32)     # (TQ, D), pre-scaled
        for g in range(G):                        # static unroll (small G)
            qg = q_ref[:, g * D:(g + 1) * D].astype(jnp.float32)
            qg = qg * cq + _rotate_half(qg) * sq
            q_scr[g * TQ:(g + 1) * TQ, :] = qg.astype(q_scr.dtype)
        m_scr[...] = jnp.full(m_scr.shape, -1e30, m_scr.dtype)
        l_scr[...] = jnp.zeros(l_scr.shape, l_scr.dtype)
        acc_scr[...] = jnp.zeros(acc_scr.shape, acc_scr.dtype)

    # Skip kv tiles entirely above the causal diagonal (their DMA is also
    # skipped by the clamped k/v index maps in attention_core).
    @pl.when(ki * TKV <= qi * TQ + (TQ - 1))
    def _compute():
        # (G*TQ, D) x (TKV, D)^T -> (G*TQ, TKV), contraction over head_dim.
        s = jax.lax.dot_general(q_scr[...], k_ref[...],
                                (((1,), (1,)), ((), ())),
                                preferred_element_type=jnp.float32)

        def _online_update(scores):
            m_prev = m_scr[...]
            m_new = jnp.maximum(m_prev, jnp.max(scores, axis=-1, keepdims=True))
            alpha = jnp.exp(m_prev - m_new)
            p = jnp.exp(scores - m_new)
            l_scr[...] = alpha * l_scr[...] + jnp.sum(p, axis=-1, keepdims=True)
            acc_scr[...] = alpha * acc_scr[...] + jnp.dot(
                p.astype(v_ref.dtype), v_ref[...],
                preferred_element_type=jnp.float32)
            m_scr[...] = m_new

        # Only diagonal-straddling tiles pay for the mask.
        straddles = ki * TKV + (TKV - 1) > qi * TQ

        @pl.when(straddles)
        def _masked():
            rows = jax.lax.broadcasted_iota(jnp.int32, (G * TQ, TKV), 0)
            if (TQ & (TQ - 1)) == 0:
                rows = rows & (TQ - 1)     # row index within the q tile
            else:
                rows = rows % TQ
            q_pos = qi * TQ + rows
            k_pos = ki * TKV + jax.lax.broadcasted_iota(jnp.int32,
                                                        (G * TQ, TKV), 1)
            _online_update(jnp.where(k_pos <= q_pos, s, -1e30))

        @pl.when(jnp.logical_not(straddles))
        def _unmasked():
            _online_update(s)

    @pl.when(ki == nk - 1)
    def _finalize():
        # TODO(synk): attention dropout is identity in eval mode; not implemented.
        out = acc_scr[...] / l_scr[...]
        # Single lane-dense (TQ, G*D) store.
        o_ref[...] = jnp.concatenate(
            [out[g * TQ:(g + 1) * TQ, :] for g in range(G)],
            axis=-1).astype(o_ref.dtype)


def attention_core(qkv, k_rot, cos_q, sin_q, *, b, S, n_heads, n_kv, D):
    """Flash-style causal GQA attention.
    qkv:   (b*S, (n_heads+2*n_kv)*D) fused projection output (q & v columns)
    k_rot: (b*S, n_kv*D)             rotary-embedded keys
    cos_q/sin_q: (S, D)              rope tables with 1/sqrt(D) folded in
    returns ctx: (b*S, n_heads*D)
    """
    G = n_heads // n_kv
    H = n_heads * D
    # v6e/v7x: 256-wide MXU -> 256x256 tiles.  On v5e prefer TKV=128 (4x128^2
    # MXU) but keep TQ large to halve K/V re-streaming.
    TQ = _pick_tile(S, 256, 16)
    TKV = _pick_tile(S, 256, 128)
    nqb = S // TQ
    nkb = S // TKV
    grid = (b, n_kv, nqb, nkb)

    def q_map(bi, hi, qi, ki):
        return (bi * nqb + qi, hi)          # q columns: block width G*D

    def _kv_row(bi, qi, ki):
        # Clamp to the last kv block visible from this q tile; a repeated block
        # index makes Pallas skip the DMA for fully-masked (future) tiles.
        last = (qi * TQ + (TQ - 1)) // TKV
        return bi * nkb + jnp.minimum(ki, last)

    def k_map(bi, hi, qi, ki):
        return (_kv_row(bi, qi, ki), hi)                     # k_rot columns

    def v_map(bi, hi, qi, ki):
        return (_kv_row(bi, qi, ki), n_heads + n_kv + hi)    # v columns in qkv

    def cs_map(bi, hi, qi, ki):
        return (qi, 0)

    return pl.pallas_call(
        _flash_attn_kernel,
        out_shape=jax.ShapeDtypeStruct((b * S, H), qkv.dtype),
        grid=grid,
        in_specs=[
            pl.BlockSpec((TQ, G * D), q_map),
            pl.BlockSpec((TKV, D), k_map),
            pl.BlockSpec((TKV, D), v_map),
            pl.BlockSpec((TQ, D), cs_map),
            pl.BlockSpec((TQ, D), cs_map),
        ],
        out_specs=pl.BlockSpec((TQ, G * D), q_map),
        scratch_shapes=[
            pltpu.VMEM((G * TQ, D), qkv.dtype),     # rotated + scaled q
            pltpu.VMEM((G * TQ, 1), jnp.float32),   # running max m
            pltpu.VMEM((G * TQ, 1), jnp.float32),   # running sum l
            pltpu.VMEM((G * TQ, D), jnp.float32),   # output accumulator
        ],
        compiler_params=pltpu.CompilerParams(
            dimension_semantics=("parallel", "parallel", "parallel",
                                 "arbitrary")),
    )(qkv, k_rot, qkv, cos_q, sin_q)


# ------------------------------- glue (JAX) ----------------------------------

def rotary_cos_sin(position_ids, head_dim, base, dtype):
    # Matches RotaryEmbedding.forward when no dynamic frequency update triggers.
    # TODO(synk): rope_scaling / dynamic-NTK rescaling and per-sample
    # position_ids (left-padded batches) are not implemented.
    inv_freq = 1.0 / (base ** (jnp.arange(0, head_dim, 2, dtype=jnp.float32)
                               / head_dim))
    pos = position_ids.astype(jnp.float32)[0]                 # (S,)
    freqs = pos[:, None] * inv_freq[None, :]                  # (S, D/2)
    emb = jnp.concatenate([freqs, freqs], axis=-1)            # (S, D)
    return jnp.cos(emb).astype(dtype), jnp.sin(emb).astype(dtype)


def prepare_params(params):
    """One-time parameter preparation (fused qkv weight/bias) — do this at
    parameter-load time, not per forward call."""
    p = dict(params)
    p["w_qkv"] = jnp.concatenate([params["q_w"], params["k_w"], params["v_w"]],
                                 axis=1)
    p["b_qkv"] = jnp.concatenate([params["q_b"], params["k_b"], params["v_b"]],
                                 axis=0)
    return p


def attention_forward(params, hidden_states, attention_mask, position_ids, cfg):
    # TODO(synk): the kernel regenerates the module's causal mask in-kernel
    # (is_causal=True); arbitrary padding masks would need a tiled mask stream
    # or scalar-prefetched per-row lengths.
    del attention_mask
    b, S, Hdim = hidden_states.shape
    n_heads = cfg["num_attention_heads"]
    n_kv = cfg["num_key_value_heads"]
    D = Hdim // n_heads
    scale = D ** -0.5

    # Fused q/k/v projection (weights pre-fused in prepare_params).
    x = hidden_states.reshape(b * S, Hdim)
    qkv = linear(x, params["w_qkv"], params["b_qkv"])     # (b*S, (nh+2*nkv)*D)

    cos, sin = rotary_cos_sin(position_ids, D, cfg["rope_theta"],
                              hidden_states.dtype)
    # K RoPE as a small elementwise pre-pass over the K columns of qkv.
    k_rot = rope_k(qkv, cos, sin, b=b, S=S, n_heads=n_heads, n_kv=n_kv, D=D)
    # Q RoPE happens inside the attention kernel with the 1/sqrt(D) score scale
    # folded into the tables (free at runtime).
    cos_q = (cos * scale).astype(hidden_states.dtype)
    sin_q = (sin * scale).astype(hidden_states.dtype)

    ctx = attention_core(qkv, k_rot, cos_q, sin_q,
                         b=b, S=S, n_heads=n_heads, n_kv=n_kv, D=D)
    out = linear(ctx, params["o_w"], params["o_b"])
    return out.reshape(b, S, Hdim)


# ------------------------- pure-JAX reference check --------------------------

def reference_forward(params, hidden_states, attention_mask, position_ids, cfg):
    b, S, H = hidden_states.shape
    n_heads = cfg["num_attention_heads"]
    n_kv = cfg["num_key_value_heads"]
    D = H // n_heads
    G = n_heads // n_kv

    def lin(x, w, bias):
        return x @ w + bias

    q = lin(hidden_states, params["q_w"], params["q_b"]).reshape(
        b, S, n_heads, D).transpose(0, 2, 1, 3)
    k = lin(hidden_states, params["k_w"], params["k_b"]).reshape(
        b, S, n_kv, D).transpose(0, 2, 1, 3)
    v = lin(hidden_states, params["v_w"], params["v_b"]).reshape(
        b, S, n_kv, D).transpose(0, 2, 1, 3)

    cos, sin = rotary_cos_sin(position_ids, D, cfg["rope_theta"],
                              hidden_states.dtype)
    cos_, sin_ = cos[None, None], sin[None, None]

    def rot(x):
        h = x.shape[-1] // 2
        return jnp.concatenate([-x[..., h:], x[..., :h]], axis=-1)

    q = q * cos_ + rot(q) * sin_
    k = k * cos_ + rot(k) * sin_
    k = jnp.repeat(k, G, axis=1)
    v = jnp.repeat(v, G, axis=1)

    scores = jnp.einsum("bhqd,bhkd->bhqk", q, k) * (D ** -0.5) + attention_mask
    attn = jax.nn.softmax(scores, axis=-1)
    ctx = jnp.einsum("bhqk,bhkd->bhqd", attn, v).transpose(0, 2, 1, 3).reshape(
        b, S, H)
    return ctx @ params["o_w"] + params["o_b"]


# ----------------------------------- main -------------------------------------

if __name__ == "__main__":
    # Small test shapes, head_dim = 128 so the lane dim of every block is full.
    b, S = 2, 8
    n_heads, n_kv, D = 4, 2, 128
    H = n_heads * D                      # 512
    cfg = dict(num_attention_heads=n_heads, num_key_value_heads=n_kv,
               rope_theta=10000.0)

    key = jax.random.PRNGKey(0)
    ks = jax.random.split(key, 10)
    f32 = jnp.float32
    params = {
        # weights stored as (in_features, out_features) = PyTorch weight.T
        "q_w": 0.02 * jax.random.normal(ks[0], (H, H), f32),
        "q_b": 0.02 * jax.random.normal(ks[1], (H,), f32),
        "k_w": 0.02 * jax.random.normal(ks[2], (H, n_kv * D), f32),
        "k_b": 0.02 * jax.random.normal(ks[3], (n_kv * D,), f32),
        "v_w": 0.02 * jax.random.normal(ks[4], (H, n_kv * D), f32),
        "v_b": 0.02 * jax.random.normal(ks[5], (n_kv * D,), f32),
        "o_w": 0.02 * jax.random.normal(ks[6], (H, H), f32),
        "o_b": 0.02 * jax.random.normal(ks[7], (H,), f32),
    }
    params = prepare_params(params)      # one-time qkv weight fusion

    hidden_states = jax.random.normal(ks[8], (b, S, H), f32)
    position_ids = jnp.arange(S, dtype=jnp.int32)[None, :]       # (1, S)
    causal = jnp.tril(jnp.ones((S, S), dtype=bool))
    attention_mask = jnp.where(causal, 0.0, -1e9).astype(f32)
    attention_mask = jnp.broadcast_to(attention_mask[None, None], (b, 1, S, S))

    out = attention_forward(params, hidden_states, attention_mask,
                            position_ids, cfg)
    out = jax.block_until_ready(out)

    ref = reference_forward(params, hidden_states, attention_mask,
                            position_ids, cfg)
    assert out.shape == (b, S, H)
    # Relative Frobenius error (bf16 MXU inputs in the projections, f32 accum).
    rel_err = float(jnp.linalg.norm(out - ref) / jnp.linalg.norm(ref))
    assert rel_err < 2e-2, f"mismatch vs reference: rel_err={rel_err}"

    print("KERNEL_OK")
</pallas_src>

<mosaic_0001>
module attributes {stable_mosaic.version = 11 : i64} {
  func.func @_linear_kernel(%arg0: i32, %arg1: i32, %arg2: i32, %arg3: memref<16x512xf32, #tpu.memory_space<vmem>>, %arg4: memref<512x256xf32, #tpu.memory_space<vmem>>, %arg5: memref<1x256xf32, #tpu.memory_space<vmem>>, %arg6: memref<16x256xf32, #tpu.memory_space<vmem>>, %arg7: memref<16x256xf32, #tpu.memory_space<vmem>>) attributes {dimension_semantics = [#tpu.dimension_semantics<parallel>, #tpu.dimension_semantics<parallel>, #tpu.dimension_semantics<arbitrary>], iteration_bounds = array<i64: 1, 4, 1>, scalar_prefetch = 0 : i64, scratch_operands = 1 : i64, tpu.core_type = #tpu.core_type<tc>, window_params = [{transform_indices = @transform_0, window_bounds = array<i64: 16, 512>}, {transform_indices = @transform_1, window_bounds = array<i64: 512, 256>}, {transform_indices = @transform_2, window_bounds = array<i64: 1, 256>}, {transform_indices = @transform_3, window_bounds = array<i64: 16, 256>}]} {
    %c0_i32 = arith.constant 0 : i32
    %0 = arith.cmpi eq, %arg2, %c0_i32 : i32
    %1 = arith.extui %0 : i1 to i32
    %c0_i32_0 = arith.constant 0 : i32
    %2 = arith.cmpi ne, %1, %c0_i32_0 : i32
    scf.if %2 {
      %cst_10 = arith.constant 0.000000e+00 : f32
      %14 = vector.broadcast %cst_10 : f32 to vector<16x256xf32>
      %c0_11 = arith.constant 0 : index
      %c0_12 = arith.constant 0 : index
      %15 = vector.load %arg7[%c0_11, %c0_12] : memref<16x256xf32, #tpu.memory_space<vmem>>, vector<16x256xf32>
      tpu.vector_store %arg7[%c0_11, %c0_12], %14 {strides = array<i32>} : memref<16x256xf32, #tpu.memory_space<vmem>>, vector<16x256xf32>,
    } else {
    }
    %c0 = arith.constant 0 : index
    %c0_1 = arith.constant 0 : index
    %3 = vector.load %arg3[%c0, %c0_1] : memref<16x512xf32, #tpu.memory_space<vmem>>, vector<16x512xf32>
    %c0_2 = arith.constant 0 : index
    %c0_3 = arith.constant 0 : index
    %4 = vector.load %arg4[%c0_2, %c0_3] : memref<512x256xf32, #tpu.memory_space<vmem>>, vector<512x256xf32>
    %5 = arith.truncf %3 : vector<16x512xf32> to vector<16x512xbf16>
    %6 = arith.truncf %4 : vector<512x256xf32> to vector<512x256xbf16>
    %c0_4 = arith.constant 0 : index
    %c0_5 = arith.constant 0 : index
    %7 = vector.load %arg7[%c0_4, %c0_5] : memref<16x256xf32, #tpu.memory_space<vmem>>, vector<16x256xf32>
    %cst = arith.constant dense<0.000000e+00> : vector<16x256xf32>
    %8 = tpu.matmul %5, %6, %cst {dimension_numbers = #tpu.dot_dimension_numbers<[1], [0], [0], [1], [0, 0, 1, 1], [], []>} : vector<16x512xbf16>, vector<512x256xbf16>, vector<16x256xf32> -> vector<16x256xf32>
    %9 = arith.addf %7, %8 : vector<16x256xf32>
    %c0_6 = arith.constant 0 : index
    %c0_7 = arith.constant 0 : index
    %10 = vector.load %arg7[%c0_6, %c0_7] : memref<16x256xf32, #tpu.memory_space<vmem>>, vector<16x256xf32>
    tpu.vector_store %arg7[%c0_6, %c0_7], %9 {strides = array<i32>} : memref<16x256xf32, #tpu.memory_space<vmem>>, vector<16x256xf32>,
    %c0_i32_8 = arith.constant 0 : i32
    %11 = arith.cmpi eq, %arg2, %c0_i32_8 : i32
    %12 = arith.extui %11 : i1 to i32
    %c0_i32_9 = arith.constant 0 : i32
    %13 = arith.cmpi ne, %12, %c0_i32_9 : i32
    scf.if %13 {
      %c0_10 = arith.constant 0 : index
      %c0_11 = arith.constant 0 : index
      %14 = vector.load %arg7[%c0_10, %c0_11] : memref<16x256xf32, #tpu.memory_space<vmem>>, vector<16x256xf32>
      %c0_12 = arith.constant 0 : index
      %c0_13 = arith.constant 0 : index
      %15 = vector.load %arg5[%c0_12, %c0_13] : memref<1x256xf32, #tpu.memory_space<vmem>>, vector<1x256xf32>
      %16 = vector.broadcast %15 : vector<1x256xf32> to vector<16x256xf32>
      %17 = arith.addf %14, %16 : vector<16x256xf32>
      %c0_14 = arith.constant 0 : index
      %c0_15 = arith.constant 0 : index
      %18 = vector.load %arg6[%c0_14, %c0_15] : memref<16x256xf32, #tpu.memory_space<vmem>>, vector<16x256xf32>
      tpu.vector_store %arg6[%c0_14, %c0_15], %17 {strides = array<i32>} : memref<16x256xf32, #tpu.memory_space<vmem>>, vector<16x256xf32>,
    } else {
    }
    return
  }
  func.func @transform_0(%arg0: i32, %arg1: i32, %arg2: i32) -> (i32, i32) {
    %c0_i32 = arith.constant 0 : i32
    return %arg0, %arg2 : i32, i32
  }
  func.func @transform_1(%arg0: i32, %arg1: i32, %arg2: i32) -> (i32, i32) {
    %c0_i32 = arith.constant 0 : i32
    return %arg2, %arg1 : i32, i32
  }
  func.func @transform_2(%arg0: i32, %arg1: i32, %arg2: i32) -> (i32, i32) {
    %c0_i32 = arith.constant 0 : i32
    %c0_i32_0 = arith.constant 0 : i32
    return %c0_i32, %arg1 : i32, i32
  }
  func.func @transform_3(%arg0: i32, %arg1: i32, %arg2: i32) -> (i32, i32) {
    %c0_i32 = arith.constant 0 : i32
    return %arg0, %arg1 : i32, i32
  }
}

</mosaic_0001>

<llo_original>
// kernel: tpu_custom_call.1
$region0: #{tpu_custom_call.1}
  #allocation0 [shape = 'u32[]', space=smem, size = 0x4, offset = 0x4, fixed_abs, tag = 'smem constant byte address 0x4 - core index']
  #allocation1 [shape = 'u32[144,128]{1,0:T(1,128)}', space=vmem, size = 0x12000, scoped, tag = 'internal scratch']
  #allocation2 [shape = 'f32[16,256]{1,0:T(8,128)}', space=vmem, size = 0x4000, scoped, tag = 'scratch operand']
  %s0 = inlined_call_operand.hbm [shape: f32[16,512], index: 0, kind: input, shape index: {}]
  %s1 = inlined_call_operand.hbm [shape: f32[512,1024], index: 1, kind: input, shape index: {}]
  %s2 = inlined_call_operand.hbm [shape: f32[1,1024], index: 2, kind: input, shape index: {}]
  %s3 = inlined_call_operand.hbm [shape: f32[16,1024], index: 3, kind: output, shape index: {}]
  %s4 = sld [smem:[#allocation0]]
  $region65: #{tpu_custom_call.1} parent=0
    _
  %s6 = ssub.s32 1, %s4
  %s7 = scalar_select 0, %s6, %s4
  $region1: #{tpu_custom_call.1} parent=0
    #allocation3 [shape = 'u8[32768]{0}', space=vmem, size = 0x8000, scoped, tag = 'input window, operand 0, single buffered']
    #allocation4 [shape = 's32[2]{0}', space=sflag, size = 0x8, scoped, tag = 'scoped memory for tpu_custom_call.1']
    #allocation5 [shape = 's32[2]{0}', space=sflag, size = 0x8, scoped, tag = 'scoped memory for tpu_custom_call.1']
    #allocation6 [shape = 'u8[1048576]{0}', space=vmem, size = 0x100000, scoped, tag = 'input window, operand 1']
    #allocation7 [shape = 's32[2]{0}', space=sflag, size = 0x8, scoped, tag = 'scoped memory for tpu_custom_call.1']
    #allocation8 [shape = 'u8[2048]{0}', space=vmem, size = 0x800, scoped, tag = 'input window, operand 2']
    #allocation9 [shape = 'u8[32768]{0}', space=vmem, size = 0x8000, scoped, tag = 'output window, operand 0']
    %8 = vsyncpa [#allocation4], 0
    %9 = vsyncpa [#allocation7], 0
    %s10 = scalar_lea.sflag [#allocation7], 1
    %11 = vsyncpa %s10, 0
    %12 = vsyncpa [#allocation5], 0
    %s13 = scalar_lea.sflag [#allocation5], 1
    %14 = vsyncpa %s13, 0
    loop: start=0, step=1, limit=6
    $region2: #{tpu_custom_call.1} parent=1 // loop_pre_header
      _
    $region3: #{tpu_custom_call.1} parent=1 // loop_header
      %s16 = sphi 0, %s20
      %p17 = scmp.ge.s32.totalorder %s16, 6
      %s23 = sphi 0, %s42
      %s24 = sphi 0, %s38
      %s25 = sphi 0, %s34
      %s26 = sphi 0, %s23
      %s27 = sphi 0, %s24
      %s28 = sphi 0, %s25
      %s29 = sphi 0, %s26
      %s30 = sphi 0, %s27
      %s31 = sphi 0, %s28
      %s47 = sphi 0, %s49
      %s50 = sphi 0, %s47
      %s51 = sphi 0, %s50
      %s67 = sphi 0, %s51
      %s75 = sphi 0, %s77
      %s78 = sphi 0, %s75
      %s79 = sphi 0, %s78
      %s95 = sphi 0, %s79
      %s101 = sphi 0, %s103
      %s104 = sphi 0, %s101
      %s105 = sphi 0, %s104
      %s121 = sphi 0, %s105
      %s129 = sphi 0, %s131
      %s132 = sphi 0, %s129
      %s133 = sphi 0, %s132
      %s149 = sphi 0, %s133
    $region4: #{tpu_custom_call.1} parent=1 // loop_header_branch
      %19 = sbr.rel (%p17) target = $region8
    $region5: #{tpu_custom_call.1} parent=1 // loop_body
      %s21 = ssub.s32 %s16, 1
      %s22 = ssub.s32 %s16, 2
      %s32 = sadd.s32 1, %s25
      %p33 = scmp.ge.s32.totalorder %s32, 1
      %s34 = scalar_select %p33, 0, %s32
      %s35 = sadd.s32 1, %s24
      %s36 = scalar_select %p33, %s35, %s24
      %p37 = scmp.ge.s32.totalorder %s36, 4
      %s38 = scalar_select %p37, 0, %s36
      %s39 = sadd.s32 1, %s23
      %s40 = scalar_select %p37, %s39, %s23
      %p41 = scmp.ge.s32.totalorder %s40, 1
      %s42 = scalar_select %p41, 0, %s40
      %s43 = ssub.s32 %s23, %s42
      %s44 = ssub.s32 %s25, %s34
      %s45 = sor.u32 %s43, %s44
      %p46 = scmp.eq.s32.totalorder %s45, 0
      %s48 = sadd.s32 %s47, 1
      %s49 = scalar_select %p46, %s47, %s48
      %p52 = pneg %p46
      %p53 = scmp.eq.s32.totalorder %s16, 3
      %p54 = por %p52, %p53
      %p55 = scmp.ne.s32.totalorder %s47, %s50
      %p56 = scmp.eq.s32.totalorder %s16, 0
      %p57 = por %p55, %p56
      %p58 = scmp.ne.s32.totalorder %s47, %s50
      %p59 = scmp.eq.s32.totalorder %s21, 3
      %p60 = por %p58, %p59
      %p61 = scmp.ne.s32.totalorder %s50, %s51
      %p62 = scmp.eq.s32.totalorder %s21, 0
      %p63 = por %p61, %p62
      %p64 = scmp.ne.s32.totalorder %s50, %s51
      %p65 = scmp.eq.s32.totalorder %s22, 3
      %p66 = por %p64, %p65
      %p68 = scmp.ne.s32.totalorder %s51, %s67
      %p69 = scmp.eq.s32.totalorder %s22, 0
      %p70 = por %p68, %p69
      %s71 = ssub.s32 %s25, %s34
      %s72 = ssub.s32 %s24, %s38
      %s73 = sor.u32 %s71, %s72
      %p74 = scmp.eq.s32.totalorder %s73, 0
      %s76 = sadd.s32 %s75, 1
      %s77 = scalar_select %p74, %s75, %s76
      %p80 = pneg %p74
      %p81 = scmp.eq.s32.totalorder %s16, 3
      %p82 = por %p80, %p81
      %p83 = scmp.ne.s32.totalorder %s75, %s78
      %p84 = scmp.eq.s32.totalorder %s16, 0
      %p85 = por %p83, %p84
      %p86 = scmp.ne.s32.totalorder %s75, %s78
      %p87 = scmp.eq.s32.totalorder %s21, 3
      %p88 = por %p86, %p87
      %p89 = scmp.ne.s32.totalorder %s78, %s79
      %p90 = scmp.eq.s32.totalorder %s21, 0
      %p91 = por %p89, %p90
      %p92 = scmp.ne.s32.totalorder %s78, %s79
      %p93 = scmp.eq.s32.totalorder %s22, 3
      %p94 = por %p92, %p93
      %p96 = scmp.ne.s32.totalorder %s79, %s95
      %p97 = scmp.eq.s32.totalorder %s22, 0
      %p98 = por %p96, %p97
      %s99 = ssub.s32 %s24, %s38
      %p100 = scmp.eq.s32.totalorder %s99, 0
      %s102 = sadd.s32 %s101, 1
      %s103 = scalar_select %p100, %s101, %s102
      %p106 = pneg %p100
      %p107 = scmp.eq.s32.totalorder %s16, 3
      %p108 = por %p106, %p107
      %p109 = scmp.ne.s32.totalorder %s101, %s104
      %p110 = scmp.eq.s32.totalorder %s16, 0
      %p111 = por %p109, %p110
      %p112 = scmp.ne.s32.totalorder %s101, %s104
      %p113 = scmp.eq.s32.totalorder %s21, 3
      %p114 = por %p112, %p113
      %p115 = scmp.ne.s32.totalorder %s104, %s105
      %p116 = scmp.eq.s32.totalorder %s21, 0
      %p117 = por %p115, %p116
      %p118 = scmp.ne.s32.totalorder %s104, %s105
      %p119 = scmp.eq.s32.totalorder %s22, 3
      %p120 = por %p118, %p119
      %p122 = scmp.ne.s32.totalorder %s105, %s121
      %p123 = scmp.eq.s32.totalorder %s22, 0
      %p124 = por %p122, %p123
      %s125 = ssub.s32 %s23, %s42
      %s126 = ssub.s32 %s24, %s38
      %s127 = sor.u32 %s125, %s126
      %p128 = scmp.eq.s32.totalorder %s127, 0
      %s130 = sadd.s32 %s129, 1
      %s131 = scalar_select %p128, %s129, %s130
      %p134 = pneg %p128
      %p135 = scmp.eq.s32.totalorder %s16, 3
      %p136 = por %p134, %p135
      %p137 = scmp.ne.s32.totalorder %s129, %s132
      %p138 = scmp.eq.s32.totalorder %s16, 0
      %p139 = por %p137, %p138
      %p140 = scmp.ne.s32.totalorder %s129, %s132
      %p141 = scmp.eq.s32.totalorder %s21, 3
      %p142 = por %p140, %p141
      %p143 = scmp.ne.s32.totalorder %s132, %s133
      %p144 = scmp.eq.s32.totalorder %s21, 0
      %p145 = por %p143, %p144
      %p146 = scmp.ne.s32.totalorder %s132, %s133
      %p147 = scmp.eq.s32.totalorder %s22, 3
      %p148 = por %p146, %p147
      %p150 = scmp.ne.s32.totalorder %s133, %s149
      %p151 = scmp.eq.s32.totalorder %s22, 0
      %p152 = por %p150, %p151
      %p153 = scmp.le.s32.totalorder 1, %s16
      %p154 = scmp.lt.s32.totalorder %s16, 5
      %p155 = pnand %p153, %p154
      %p156 = pneg %p155
      // Predicated region
      $region9: #{tpu_custom_call.1} parent=5 // pred_check
        _
      $region10: #{tpu_custom_call.1} parent=5 // pred_check_branch
        %158 = sbr.rel (%p155) target = $region12
      $region11: #{tpu_custom_call.1} parent=5 // pred_region
        %s159 = ssub.s32 %s16, 1
        // Predicated region
        $region13: #{tpu_custom_call.1} parent=11 // pred_check
          %p160 = pneg %p63
        $region14: #{tpu_custom_call.1} parent=11 // pred_check_branch
          %162 = sbr.rel (%p160) target = $region16
        $region15: #{tpu_custom_call.1} parent=11 // pred_region
          %s163 = smul.u32 2, %s26
          %s164 = smul.u32 4, %s28
          %s166 = ssub.s32 1024, 1024
          %167 = vsyncadd [#allocation4], %s166
          %s168 = smul.addr %s163, 4
          %s169 = sadd.s32 %s164, %s168
          %s170 = smul.addr %s169, 128
          %s171 = scalar_lea.hbm %s0, %s170
          %s172 = sshll.u32 [#allocation3], 4
          %s173 = int_to_ptr.vmem [resolvable:$true] %s172
          %178 = dma.hbm_to_vmem [thread:$0]  %s171, 1024, %s173, [#allocation4], 512, 512, 32
        $region16: #{tpu_custom_call.1} parent=11 // pred_fallthru
          _
      $region12: #{tpu_custom_call.1} parent=5 // pred_fallthru
        _
      %p179 = scmp.lt.s32.totalorder %s16, 4
      // Predicated region
      $region17: #{tpu_custom_call.1} parent=5 // pred_check
        %p180 = pneg %p179
      $region18: #{tpu_custom_call.1} parent=5 // pred_check_branch
        %182 = sbr.rel (%p180) target = $region20
      $region19: #{tpu_custom_call.1} parent=5 // pred_region
        // Predicated region
        $region21: #{tpu_custom_call.1} parent=19 // pred_check
          %p183 = pneg %p85
        $region22: #{tpu_custom_call.1} parent=19 // pred_check_branch
          %185 = sbr.rel (%p183) target = $region24
        $region23: #{tpu_custom_call.1} parent=19 // pred_region
          %s186 = sand.u32 %s16, 1
          %s187 = scalar_lea.sflag [#allocation7], %s186
          %s188 = sand.u32 %s75, 1
          %s189 = smul.addr %s188, 1024
          %s190 = scalar_lea.vmem [#allocation6], %s189
          %s191 = smul.u32 64, %s25
          %s192 = smul.u32 2, %s24
          %s194 = ssub.s32 16384, 16384
          %195 = vsyncadd %s187, %s194
          %s196 = smul.addr %s191, 8
          %s197 = sadd.s32 %s192, %s196
          %s198 = smul.addr %s197, 128
          %s199 = scalar_lea.hbm %s1, %s198
          %s200 = sshll.u32 %s190, 4
          %s201 = int_to_ptr.vmem [resolvable:$true] %s200
          %206 = dma.hbm_to_vmem [thread:$0]  %s199, 16384, %s201, %s187, 1024, 256, 16
        $region24: #{tpu_custom_call.1} parent=19 // pred_fallthru
          _
        // Predicated region
        $region25: #{tpu_custom_call.1} parent=19 // pred_check
          %p207 = pneg %p111
        $region26: #{tpu_custom_call.1} parent=19 // pred_check_branch
          %209 = sbr.rel (%p207) target = $region28
        $region27: #{tpu_custom_call.1} parent=19 // pred_region
          %s210 = sand.u32 %s16, 1
          %s211 = scalar_lea.sflag [#allocation7], %s210
          %s212 = sand.u32 %s101, 1
          %s213 = smul.addr %s212, 2
          %s214 = scalar_lea.vmem [#allocation8], %s213
          %s215 = smul.u32 2, %s24
          %s217 = ssub.s32 32, 32
          %218 = vsyncadd %s211, %s217
          %s219 = smul.addr %s215, 16
          %s220 = scalar_lea.hbm %s2, %s219
          %s222 = sshll.u32 %s214, 4
          %s223 = int_to_ptr.vmem [resolvable:$true] %s222
          %225 = dma.hbm_to_vmem [thread:$0]  %s220, 32, %s223, %s211
        $region28: #{tpu_custom_call.1} parent=19 // pred_fallthru
          _
      $region20: #{tpu_custom_call.1} parent=5 // pred_fallthru
        _
      %p226 = scmp.le.s32.totalorder 1, %s16
      %p227 = scmp.lt.s32.totalorder %s16, 5
      %p228 = pnand %p226, %p227
      %p229 = pneg %p228
      // Predicated region
      $region29: #{tpu_custom_call.1} parent=5 // pred_check
        _
      $region30: #{tpu_custom_call.1} parent=5 // pred_check_branch
        %231 = sbr.rel (%p228) target = $region32
      $region31: #{tpu_custom_call.1} parent=5 // pred_region
        %s232 = ssub.s32 %s16, 1
        // Predicated region
        $region33: #{tpu_custom_call.1} parent=31 // pred_check
          %p233 = pneg %p63
        $region34: #{tpu_custom_call.1} parent=31 // pred_check_branch
          %235 = sbr.rel (%p233) target = $region36
        $region35: #{tpu_custom_call.1} parent=31 // pred_region
          %236 = dma.done [#allocation4], 1024
        $region36: #{tpu_custom_call.1} parent=31 // pred_fallthru
          _
        %s237 = sand.u32 %s21, 1
        %s238 = scalar_lea.sflag [#allocation7], %s237
        %s239 = sand.u32 %s78, 1
        %s240 = smul.addr %s239, 1024
        %s241 = scalar_lea.vmem [#allocation6], %s240
        // Predicated region
        $region37: #{tpu_custom_call.1} parent=31 // pred_check
          %p242 = pneg %p91
        $region38: #{tpu_custom_call.1} parent=31 // pred_check_branch
          %244 = sbr.rel (%p242) target = $region40
        $region39: #{tpu_custom_call.1} parent=31 // pred_region
          %245 = dma.done %s238, 16384
        $region40: #{tpu_custom_call.1} parent=31 // pred_fallthru
          _
        %s246 = sand.u32 %s21, 1
        %s247 = scalar_lea.sflag [#allocation7], %s246
        %s248 = sand.u32 %s104, 1
        %s249 = smul.addr %s248, 2
        %s250 = scalar_lea.vmem [#allocation8], %s249
        // Predicated region
        $region41: #{tpu_custom_call.1} parent=31 // pred_check
          %p251 = pneg %p117
        $region42: #{tpu_custom_call.1} parent=31 // pred_check_branch
          %253 = sbr.rel (%p251) target = $region44
        $region43: #{tpu_custom_call.1} parent=31 // pred_region
          %254 = dma.done %s247, 32
        $region44: #{tpu_custom_call.1} parent=31 // pred_fallthru
          _
        %p255 = pneg %p63
        %p256 = pneg %p60
        %s257 = sand.u32 %s21, 1
        %s258 = scalar_lea.sflag [#allocation7], %s257
        %s259 = sand.u32 %s78, 1
        %s260 = smul.addr %s259, 1024
        %s261 = scalar_lea.vmem [#allocation6], %s260
        %p262 = pneg %p91
        %p263 = pneg %p88
        %s264 = sand.u32 %s21, 1
        %s265 = scalar_lea.sflag [#allocation7], %s264
        %s266 = sand.u32 %s104, 1
        %s267 = smul.addr %s266, 2
        %s268 = scalar_lea.vmem [#allocation8], %s267
        %p269 = pneg %p117
        %p270 = pneg %p114
        %p271 = pneg %p145
        %p272 = pneg %p142
        %s273 = sand.u32 %s132, 1
        %s274 = scalar_lea.sflag [#allocation5], %s273
        %s275 = sand.u32 %s132, 1
        %s276 = smul.addr %s275, 32
        %s277 = scalar_lea.vmem [#allocation9], %s276
        %s278 = smul.u32 2, %s26
        %s279 = smul.u32 4, %s28
        %s280 = smul.u32 64, %s28
        %s281 = smul.u32 2, %s27
        %s282 = smul.u32 2, %s27
        %s283 = smul.u32 2, %s26
        %s284 = smul.u32 2, %s27
        %p285 = scmp.eq.s32.totalorder %s28, 0
        // Predicated region
        $region45: #{tpu_custom_call.1} parent=31 // pred_check
          %p286 = pneg %p285
        $region46: #{tpu_custom_call.1} parent=31 // pred_check_branch
          %288 = sbr.rel (%p286) target = $region48
        $region47: #{tpu_custom_call.1} parent=31 // pred_region
          %289 = vst [vmem:[#allocation2] sm:$0xff] 0.0
          %290 = vst [vmem:[#allocation2 + $0x8] sm:$0xff] 0.0
          %291 = vst [vmem:[#allocation2 + $0x10] sm:$0xff] 0.0
          %292 = vst [vmem:[#allocation2 + $0x18] sm:$0xff] 0.0
        $region48: #{tpu_custom_call.1} parent=31 // pred_fallthru
          _
        %v293 = vld [vmem:[#allocation3] sm:$0xff]
        %v294 = vld [vmem:[#allocation3 + $0x8] sm:$0xff]
        %v295 = vld [vmem:[#allocation3 + $0x10] sm:$0xff]
        %v296 = vld [vmem:[#allocation3 + $0x18] sm:$0xff]
        %v297 = vld [vmem:[#allocation3 + $0x20] sm:$0xff]
        %v298 = vld [vmem:[#allocation3 + $0x28] sm:$0xff]
        %v299 = vld [vmem:[#allocation3 + $0x30] sm:$0xff]
        %v300 = vld [vmem:[#allocation3 + $0x38] sm:$0xff]
        %v301 = vld [vmem:[%s241] sm:$0xff]
        %v302 = vld [vmem:[%s241 + $0x8] sm:$0xff]
        %v303 = vld [vmem:[%s241 + $0x10] sm:$0xff]
        %v304 = vld [vmem:[%s241 + $0x18] sm:$0xff]
        %v305 = vld [vmem:[%s241 + $0x20] sm:$0xff]
        %v306 = vld [vmem:[%s241 + $0x28] sm:$0xff]
        %v307 = vld [vmem:[%s241 + $0x30] sm:$0xff]
        %v308 = vld [vmem:[%s241 + $0x38] sm:$0xff]
        %v309 = vld [vmem:[%s241 + $0x40] sm:$0xff]
        %v310 = vld [vmem:[%s241 + $0x48] sm:$0xff]
        %v311 = vld [vmem:[%s241 + $0x50] sm:$0xff]
        %v312 = vld [vmem:[%s241 + $0x58] sm:$0xff]
        %v313 = vld [vmem:[%s241 + $0x60] sm:$0xff]
        %v314 = vld [vmem:[%s241 + $0x68] sm:$0xff]
        %v315 = vld [vmem:[%s241 + $0x70] sm:$0xff]
        %v316 = vld [vmem:[%s241 + $0x78] sm:$0xff]
        %v317 = vld [vmem:[%s241 + $0x80] sm:$0xff]
        %v318 = vld [vmem:[%s241 + $0x88] sm:$0xff]
        %v319 = vld [vmem:[%s241 + $0x90] sm:$0xff]
        %v320 = vld [vmem:[%s241 + $0x98] sm:$0xff]
        %v321 = vld [vmem:[%s241 + $0xa0] sm:$0xff]
        %v322 = vld [vmem:[%s241 + $0xa8] sm:$0xff]
        %v323 = vld [vmem:[%s241 + $0xb0] sm:$0xff]
        %v324 = vld [vmem:[%s241 + $0xb8] sm:$0xff]
        %v325 = vld [vmem:[%s241 + $0xc0] sm:$0xff]
        %v326 = vld [vmem:[%s241 + $0xc8] sm:$0xff]
        %v327 = vld [vmem:[%s241 + $0xd0] sm:$0xff]
        %v328 = vld [vmem:[%s241 + $0xd8] sm:$0xff]
        %v329 = vld [vmem:[%s241 + $0xe0] sm:$0xff]
        %v330 = vld [vmem:[%s241 + $0xe8] sm:$0xff]
        %v331 = vld [vmem:[%s241 + $0xf0] sm:$0xff]
        %v332 = vld [vmem:[%s241 + $0xf8] sm:$0xff]
        %v333 = vld [vmem:[%s241 + $0x100] sm:$0xff]
        %v334 = vld [vmem:[%s241 + $0x108] sm:$0xff]
        %v335 = vld [vmem:[%s241 + $0x110] sm:$0xff]
        %v336 = vld [vmem:[%s241 + $0x118] sm:$0xff]
        %v337 = vld [vmem:[%s241 + $0x120] sm:$0xff]
        %v338 = vld [vmem:[%s241 + $0x128] sm:$0xff]
        %v339 = vld [vmem:[%s241 + $0x130] sm:$0xff]
        %v340 = vld [vmem:[%s241 + $0x138] sm:$0xff]
        %v341 = vld [vmem:[%s241 + $0x140] sm:$0xff]
        %v342 = vld [vmem:[%s241 + $0x148] sm:$0xff]
        %v343 = vld [vmem:[%s241 + $0x150] sm:$0xff]
        %v344 = vld [vmem:[%s241 + $0x158] sm:$0xff]
        %v345 = vld [vmem:[%s241 + $0x160] sm:$0xff]
        %v346 = vld [vmem:[%s241 + $0x168] sm:$0xff]
        %v347 = vld [vmem:[%s241 + $0x170] sm:$0xff]
        %v348 = vld [vmem:[%s241 + $0x178] sm:$0xff]
        %v349 = vld [vmem:[%s241 + $0x180] sm:$0xff]
        %v350 = vld [vmem:[%s241 + $0x188] sm:$0xff]
        %v351 = vld [vmem:[%s241 + $0x190] sm:$0xff]
        %v352 = vld [vmem:[%s241 + $0x198] sm:$0xff]
        %v353 = vld [vmem:[%s241 + $0x1a0] sm:$0xff]
        %v354 = vld [vmem:[%s241 + $0x1a8] sm:$0xff]
        %v355 = vld [vmem:[%s241 + $0x1b0] sm:$0xff]
        %v356 = vld [vmem:[%s241 + $0x1b8] sm:$0xff]
        %v357 = vld [vmem:[%s241 + $0x1c0] sm:$0xff]
        %v358 = vld [vmem:[%s241 + $0x1c8] sm:$0xff]
        %v359 = vld [vmem:[%s241 + $0x1d0] sm:$0xff]
        %v360 = vld [vmem:[%s241 + $0x1d8] sm:$0xff]
        %v361 = vld [vmem:[%s241 + $0x1e0] sm:$0xff]
        %v362 = vld [vmem:[%s241 + $0x1e8] sm:$0xff]
        %v363 = vld [vmem:[%s241 + $0x1f0] sm:$0xff]
        %v364 = vld [vmem:[%s241 + $0x1f8] sm:$0xff]
        %v365 = vld [vmem:[%s241 + $0x200] sm:$0xff]
        %v366 = vld [vmem:[%s241 + $0x208] sm:$0xff]
        %v367 = vld [vmem:[%s241 + $0x210] sm:$0xff]
        %v368 = vld [vmem:[%s241 + $0x218] sm:$0xff]
        %v369 = vld [vmem:[%s241 + $0x220] sm:$0xff]
        %v370 = vld [vmem:[%s241 + $0x228] sm:$0xff]
        %v371 = vld [vmem:[%s241 + $0x230] sm:$0xff]
        %v372 = vld [vmem:[%s241 + $0x238] sm:$0xff]
        %v373 = vld [vmem:[%s241 + $0x240] sm:$0xff]
        %v374 = vld [vmem:[%s241 + $0x248] sm:$0xff]
        %v375 = vld [vmem:[%s241 + $0x250] sm:$0xff]
        %v376 = vld [vmem:[%s241 + $0x258] sm:$0xff]
        %v377 = vld [vmem:[%s241 + $0x260] sm:$0xff]
        %v378 = vld [vmem:[%s241 + $0x268] sm:$0xff]
        %v379 = vld [vmem:[%s241 + $0x270] sm:$0xff]
        %v380 = vld [vmem:[%s241 + $0x278] sm:$0xff]
        %v381 = vld [vmem:[%s241 + $0x280] sm:$0xff]
        %v382 = vld [vmem:[%s241 + $0x288] sm:$0xff]
        %v383 = vld [vmem:[%s241 + $0x290] sm:$0xff]
        %v384 = vld [vmem:[%s241 + $0x298] sm:$0xff]
        %v385 = vld [vmem:[%s241 + $0x2a0] sm:$0xff]
        %v386 = vld [vmem:[%s241 + $0x2a8] sm:$0xff]
        %v387 = vld [vmem:[%s241 + $0x2b0] sm:$0xff]
        %v388 = vld [vmem:[%s241 + $0x2b8] sm:$0xff]
        %v389 = vld [vmem:[%s241 + $0x2c0] sm:$0xff]
        %v390 = vld [vmem:[%s241 + $0x2c8] sm:$0xff]
        %v391 = vld [vmem:[%s241 + $0x2d0] sm:$0xff]
        %v392 = vld [vmem:[%s241 + $0x2d8] sm:$0xff]
        %v393 = vld [vmem:[%s241 + $0x2e0] sm:$0xff]
        %v394 = vld [vmem:[%s241 + $0x2e8] sm:$0xff]
        %v395 = vld [vmem:[%s241 + $0x2f0] sm:$0xff]
        %v396 = vld [vmem:[%s241 + $0x2f8] sm:$0xff]
        %v397 = vld [vmem:[%s241 + $0x300] sm:$0xff]
        %v398 = vld [vmem:[%s241 + $0x308] sm:$0xff]
        %v399 = vld [vmem:[%s241 + $0x310] sm:$0xff]
        %v400 = vld [vmem:[%s241 + $0x318] sm:$0xff]
        %v401 = vld [vmem:[%s241 + $0x320] sm:$0xff]
        %v402 = vld [vmem:[%s241 + $0x328] sm:$0xff]
        %v403 = vld [vmem:[%s241 + $0x330] sm:$0xff]
        %v404 = vld [vmem:[%s241 + $0x338] sm:$0xff]
        %v405 = vld [vmem:[%s241 + $0x340] sm:$0xff]
        %v406 = vld [vmem:[%s241 + $0x348] sm:$0xff]
        %v407 = vld [vmem:[%s241 + $0x350] sm:$0xff]
        %v408 = vld [vmem:[%s241 + $0x358] sm:$0xff]
        %v409 = vld [vmem:[%s241 + $0x360] sm:$0xff]
        %v410 = vld [vmem:[%s241 + $0x368] sm:$0xff]
        %v411 = vld [vmem:[%s241 + $0x370] sm:$0xff]
        %v412 = vld [vmem:[%s241 + $0x378] sm:$0xff]
        %v413 = vld [vmem:[%s241 + $0x380] sm:$0xff]
        %v414 = vld [vmem:[%s241 + $0x388] sm:$0xff]
        %v415 = vld [vmem:[%s241 + $0x390] sm:$0xff]
        %v416 = vld [vmem:[%s241 + $0x398] sm:$0xff]
        %v417 = vld [vmem:[%s241 + $0x3a0] sm:$0xff]
        %v418 = vld [vmem:[%s241 + $0x3a8] sm:$0xff]
        %v419 = vld [vmem:[%s241 + $0x3b0] sm:$0xff]
        %v420 = vld [vmem:[%s241 + $0x3b8] sm:$0xff]
        %v421 = vld [vmem:[%s241 + $0x3c0] sm:$0xff]
        %v422 = vld [vmem:[%s241 + $0x3c8] sm:$0xff]
        %v423 = vld [vmem:[%s241 + $0x3d0] sm:$0xff]
        %v424 = vld [vmem:[%s241 + $0x3d8] sm:$0xff]
        %v425 = vld [vmem:[%s241 + $0x3e0] sm:$0xff]
        %v426 = vld [vmem:[%s241 + $0x3e8] sm:$0xff]
        %v427 = vld [vmem:[%s241 + $0x3f0] sm:$0xff]
        %v428 = vld [vmem:[%s241 + $0x3f8] sm:$0xff]
        %v429 = vpack.c.bf16 %v297, %v293
        %v430 = vpack.c.bf16 %v298, %v294
        %v431 = vpack.c.bf16 %v299, %v295
        %v432 = vpack.c.bf16 %v300, %v296
        %v433 = vpack.c.bf16 %v303, %v301
        %v434 = vpack.c.bf16 %v304, %v302
        %v435 = vpack.c.bf16 %v307, %v305
        %v436 = vpack.c.bf16 %v308, %v306
        %v437 = vpack.c.bf16 %v311, %v309
        %v438 = vpack.c.bf16 %v312, %v310
        %v439 = vpack.c.bf16 %v315, %v313
        %v440 = vpack.c.bf16 %v316, %v314
        %v441 = vpack.c.bf16 %v319, %v317
        %v442 = vpack.c.bf16 %v320, %v318
        %v443 = vpack.c.bf16 %v323, %v321
        %v444 = vpack.c.bf16 %v324, %v322
        %v445 = vpack.c.bf16 %v327, %v325
        %v446 = vpack.c.bf16 %v328, %v326
        %v447 = vpack.c.bf16 %v331, %v329
        %v448 = vpack.c.bf16 %v332, %v330
        %v449 = vpack.c.bf16 %v335, %v333
        %v450 = vpack.c.bf16 %v336, %v334
        %v451 = vpack.c.bf16 %v339, %v337
        %v452 = vpack.c.bf16 %v340, %v338
        %v453 = vpack.c.bf16 %v343, %v341
        %v454 = vpack.c.bf16 %v344, %v342
        %v455 = vpack.c.bf16 %v347, %v345
        %v456 = vpack.c.bf16 %v348, %v346
        %v457 = vpack.c.bf16 %v351, %v349
        %v458 = vpack.c.bf16 %v352, %v350
        %v459 = vpack.c.bf16 %v355, %v353
        %v460 = vpack.c.bf16 %v356, %v354
        %v461 = vpack.c.bf16 %v359, %v357
        %v462 = vpack.c.bf16 %v360, %v358
        %v463 = vpack.c.bf16 %v363, %v361
        %v464 = vpack.c.bf16 %v364, %v362
        %v465 = vpack.c.bf16 %v367, %v365
        %v466 = vpack.c.bf16 %v368, %v366
        %v467 = vpack.c.bf16 %v371, %v369
        %v468 = vpack.c.bf16 %v372, %v370
        %v469 = vpack.c.bf16 %v375, %v373
        %v470 = vpack.c.bf16 %v376, %v374
        %v471 = vpack.c.bf16 %v379, %v377
        %v472 = vpack.c.bf16 %v380, %v378
        %v473 = vpack.c.bf16 %v383, %v381
        %v474 = vpack.c.bf16 %v384, %v382
        %v475 = vpack.c.bf16 %v387, %v385
        %v476 = vpack.c.bf16 %v388, %v386
        %v477 = vpack.c.bf16 %v391, %v389
        %v478 = vpack.c.bf16 %v392, %v390
        %v479 = vpack.c.bf16 %v395, %v393
        %v480 = vpack.c.bf16 %v396, %v394
        %v481 = vpack.c.bf16 %v399, %v397
        %v482 = vpack.c.bf16 %v400, %v398
        %v483 = vpack.c.bf16 %v403, %v401
        %v484 = vpack.c.bf16 %v404, %v402
        %v485 = vpack.c.bf16 %v407, %v405
        %v486 = vpack.c.bf16 %v408, %v406
        %v487 = vpack.c.bf16 %v411, %v409
        %v488 = vpack.c.bf16 %v412, %v410
        %v489 = vpack.c.bf16 %v415, %v413
        %v490 = vpack.c.bf16 %v416, %v414
        %v491 = vpack.c.bf16 %v419, %v417
        %v492 = vpack.c.bf16 %v420, %v418
        %v493 = vpack.c.bf16 %v423, %v421
        %v494 = vpack.c.bf16 %v424, %v422
        %v495 = vpack.c.bf16 %v427, %v425
        %v496 = vpack.c.bf16 %v428, %v426
        %v497 = vld [vmem:[#allocation2] sm:$0xff]
        %v498 = vld [vmem:[#allocation2 + $0x8] sm:$0xff]
        %v499 = vld [vmem:[#allocation2 + $0x10] sm:$0xff]
        %v500 = vld [vmem:[#allocation2 + $0x18] sm:$0xff]
        %501 = vmatprep.subr.bf16.mxu0 %v448
        %502 = vmatpush1.bf16.msra.mxu0 %v447
        %503 = vmatprep.subr.bf16.mxu0 %v446
        %504 = vmatpush1.bf16.msra.mxu0 %v445
        %505 = vmatprep.subr.bf16.mxu0 %v444
        %506 = vmatpush1.bf16.msra.mxu0 %v443
        %507 = vmatprep.subr.bf16.mxu0 %v442
        %508 = vmatpush1.bf16.msra.mxu0 %v441
        %509 = vmatprep.subr.bf16.mxu0 %v440
        %510 = vmatpush1.bf16.msra.mxu0 %v439
        %511 = vmatprep.subr.bf16.mxu0 %v438
        %512 = vmatpush1.bf16.msra.mxu0 %v437
        %513 = vmatprep.subr.bf16.mxu0 %v436
        %514 = vmatpush1.bf16.msra.mxu0 %v435
        %515 = vmatprep.subr.bf16.mxu0 %v434
        %516 = vmatpush1.bf16.msra.mxu0 %v433
        %517 = vmatprep.subr.bf16.mxu0 %v464
        %518 = vmatpush2.bf16.msra.mxu0 %v463
        %519 = vmatprep.subr.bf16.mxu0 %v462
        %520 = vmatpush2.bf16.msra.mxu0 %v461
        %521 = vmatprep.subr.bf16.mxu0 %v460
        %522 = vmatpush2.bf16.msra.mxu0 %v459
        %523 = vmatprep.subr.bf16.mxu0 %v458
        %524 = vmatpush2.bf16.msra.mxu0 %v457
        %525 = vmatprep.subr.bf16.mxu0 %v456
        %526 = vmatpush2.bf16.msra.mxu0 %v455
        %527 = vmatprep.subr.bf16.mxu0 %v454
        %528 = vmatpush2.bf16.msra.mxu0 %v453
        %529 = vmatprep.subr.bf16.mxu0 %v452
        %530 = vmatpush2.bf16.msra.mxu0 %v451
        %531 = vmatprep.subr.bf16.mxu0 %v450
        %532 = vmatpush2.bf16.msra.mxu0 %v449
        %533 = vmatprep.mubr.bf16.mxu0 %v430
        %534 = vmatmul.mubr.bf16.gmra.mxu0 %v429
        %v535 = vpop.f32.mrf.mxu0
        %v536 = vadd.f32 0.0, %v535
        %v537 = vpop.f32.mrf.mxu0
        %v538 = vadd.f32 0.0, %v537
        %v539 = vpop.f32.mrf.mxu0
        %v540 = vadd.f32 0.0, %v539
        %v541 = vpop.f32.mrf.mxu0
        %v542 = vadd.f32 0.0, %v541
        %543 = vdwg.mxu0
        %544 = vmatprep.subr.bf16.mxu0 %v480
        %545 = vmatpush1.bf16.msra.mxu0 %v479
        %546 = vmatprep.subr.bf16.mxu0 %v478
        %547 = vmatpush1.bf16.msra.mxu0 %v477
        %548 = vmatprep.subr.bf16.mxu0 %v476
        %549 = vmatpush1.bf16.msra.mxu0 %v475
        %550 = vmatprep.subr.bf16.mxu0 %v474
        %551 = vmatpush1.bf16.msra.mxu0 %v473
        %552 = vmatprep.subr.bf16.mxu0 %v472
        %553 = vmatpush1.bf16.msra.mxu0 %v471
        %554 = vmatprep.subr.bf16.mxu0 %v470
        %555 = vmatpush1.bf16.msra.mxu0 %v469
        %556 = vmatprep.subr.bf16.mxu0 %v468
        %557 = vmatpush1.bf16.msra.mxu0 %v467
        %558 = vmatprep.subr.bf16.mxu0 %v466
        %559 = vmatpush1.bf16.msra.mxu0 %v465
        %560 = vmatprep.subr.bf16.mxu0 %v496
        %561 = vmatpush2.bf16.msra.mxu0 %v495
        %562 = vmatprep.subr.bf16.mxu0 %v494
        %563 = vmatpush2.bf16.msra.mxu0 %v493
        %564 = vmatprep.subr.bf16.mxu0 %v492
        %565 = vmatpush2.bf16.msra.mxu0 %v491
        %566 = vmatprep.subr.bf16.mxu0 %v490
        %567 = vmatpush2.bf16.msra.mxu0 %v489
        %568 = vmatprep.subr.bf16.mxu0 %v488
        %569 = vmatpush2.bf16.msra.mxu0 %v487
        %570 = vmatprep.subr.bf16.mxu0 %v486
        %571 = vmatpush2.bf16.msra.mxu0 %v485
        %572 = vmatprep.subr.bf16.mxu0 %v484
        %573 = vmatpush2.bf16.msra.mxu0 %v483
        %574 = vmatprep.subr.bf16.mxu0 %v482
        %575 = vmatpush2.bf16.msra.mxu0 %v481
        %576 = vmatprep.mubr.bf16.mxu0 %v432
        %577 = vmatmul.mubr.bf16.gmra.mxu0 %v431
        %v578 = vpop.f32.mrf.mxu0
        %v579 = vadd.f32 %v536, %v578
        %v580 = vpop.f32.mrf.mxu0
        %v581 = vadd.f32 %v538, %v580
        %v582 = vpop.f32.mrf.mxu0
        %v583 = vadd.f32 %v540, %v582
        %v584 = vpop.f32.mrf.mxu0
        %v585 = vadd.f32 %v542, %v584
        %586 = vdwg.mxu0
        %v587 = vadd.f32 %v497, %v579
        %v588 = vadd.f32 %v498, %v581
        %v589 = vadd.f32 %v499, %v583
        %v590 = vadd.f32 %v500, %v585
        %591 = vst [vmem:[#allocation2] sm:$0xff] %v587
        %592 = vst [vmem:[#allocation2 + $0x8] sm:$0xff] %v588
        %593 = vst [vmem:[#allocation2 + $0x10] sm:$0xff] %v589
        %594 = vst [vmem:[#allocation2 + $0x18] sm:$0xff] %v590
        // Predicated region
        $region49: #{tpu_custom_call.1} parent=31 // pred_check
          %p595 = pneg %p285
        $region50: #{tpu_custom_call.1} parent=31 // pred_check_branch
          %597 = sbr.rel (%p595) target = $region52
        $region51: #{tpu_custom_call.1} parent=31 // pred_region
          %v598 = vld [vmem:[#allocation2] sm:$0xff]
          %v599 = vld [vmem:[#allocation2 + $0x8] sm:$0xff]
          %v600 = vld [vmem:[#allocation2 + $0x10] sm:$0xff]
          %v601 = vld [vmem:[#allocation2 + $0x18] sm:$0xff]
          %v602 = vld [vmem:[%s250] sm:$0x3]
          %v604 = vlaneseq
          %v605 = vshrl.u32 %v604, 7
          %v606 = vsub.s32 0, %v605
          %v607 = vrot.slane %v602, %v606
          %v608 = vlaneseq
          %v609 = vshrl.u32 %v608, 7
          %v610 = vsub.s32 1, %v609
          %v611 = vrot.slane %v602, %v610
          %v614 = vadd.f32 %v598, %v607
          %v615 = vadd.f32 %v599, %v611
          %v616 = vadd.f32 %v600, %v607
          %v617 = vadd.f32 %v601, %v611
          %618 = vst [vmem:[%s277] sm:$0xff] %v614
          %619 = vst [vmem:[%s277 + $0x8] sm:$0xff] %v615
          %620 = vst [vmem:[%s277 + $0x10] sm:$0xff] %v616
          %621 = vst [vmem:[%s277 + $0x18] sm:$0xff] %v617
        $region52: #{tpu_custom_call.1} parent=31 // pred_fallthru
          _
        %s622 = sand.u32 %s132, 1
        %s623 = scalar_lea.sflag [#allocation5], %s622
        %s624 = sand.u32 %s132, 1
        %s625 = smul.addr %s624, 32
        %s626 = scalar_lea.vmem [#allocation9], %s625
        // Predicated region
        $region53: #{tpu_custom_call.1} parent=31 // pred_check
          %p627 = pneg %p142
        $region54: #{tpu_custom_call.1} parent=31 // pred_check_branch
          %629 = sbr.rel (%p627) target = $region56
        $region55: #{tpu_custom_call.1} parent=31 // pred_region
          %s630 = smul.u32 2, %s26
          %s631 = smul.u32 2, %s27
          %s633 = ssub.s32 512, 512
          %634 = vsyncadd %s623, %s633
          %s635 = smul.addr %s630, 8
          %s636 = sadd.s32 %s631, %s635
          %s637 = smul.addr %s636, 128
          %s638 = scalar_lea.hbm %s3, %s637
          %s639 = sshll.u32 %s626, 4
          %s640 = int_to_ptr.vmem [resolvable:$true] %s639
          %645 = dma.vmem_to_hbm [thread:$0]  %s640, 512, %s638, %s623, 256, 1024, 16
        $region56: #{tpu_custom_call.1} parent=31 // pred_fallthru
          _
      $region32: #{tpu_custom_call.1} parent=5 // pred_fallthru
        _
      %p646 = scmp.le.s32.totalorder 2, %s16
      // Predicated region
      $region57: #{tpu_custom_call.1} parent=5 // pred_check
        %p647 = pneg %p646
      $region58: #{tpu_custom_call.1} parent=5 // pred_check_branch
        %649 = sbr.rel (%p647) target = $region60
      $region59: #{tpu_custom_call.1} parent=5 // pred_region
        %s650 = ssub.s32 %s16, 2
        // Predicated region
        $region61: #{tpu_custom_call.1} parent=59 // pred_check
          %p651 = pneg %p148
        $region62: #{tpu_custom_call.1} parent=59 // pred_check_branch
          %653 = sbr.rel (%p651) target = $region64
        $region63: #{tpu_custom_call.1} parent=59 // pred_region
          %s654 = sand.u32 %s133, 1
          %s655 = scalar_lea.sflag [#allocation5], %s654
          %s656 = sand.u32 %s133, 1
          %s657 = smul.addr %s656, 32
          %s658 = scalar_lea.vmem [#allocation9], %s657
          %659 = dma.done %s655, 512
        $region64: #{tpu_custom_call.1} parent=59 // pred_fallthru
          _
      $region60: #{tpu_custom_call.1} parent=5 // pred_fallthru
        _
    $region6: #{tpu_custom_call.1} parent=1 // loop_footer
      %s20 = sadd.s32 1, %s16
    $region7: #{tpu_custom_call.1} parent=1 // loop_footer_branch
      %15 = sbr.rel target = $region3
    $region8: #{tpu_custom_call.1} parent=1 // loop_exit
      _
    %660 = vsyncpa [#allocation4], 1
    %s661 = scalar_lea.sflag [#allocation4], 1
    %662 = vsyncpa %s661, 1
    %663 = vsyncpa [#allocation7], 1
    %s664 = scalar_lea.sflag [#allocation7], 1
    %665 = vsyncpa %s664, 1
    %666 = vsyncpa [#allocation5], 1
    %s667 = scalar_lea.sflag [#allocation5], 1
    %668 = vsyncpa %s667, 1

</llo_original>
